<compile_context>
chip_gen: v6e
topology: v6e:2x2x1
jax: 0.10.0
libtpu: 0.0.40
codegen_flags: <defaults>
</compile_context>

<pallas_src>
import functools

import jax
import jax.numpy as jnp
from jax.experimental import pallas as pl
from jax.experimental.pallas import tpu as pltpu


def _nan_to_num_scale(scale):
    # torch.nan_to_num(scale, nan=0.0, posinf=1.0, neginf=-1.0)
    scale = jnp.where(jnp.isnan(scale), 0.0, scale)
    scale = jnp.where(scale == jnp.inf, 1.0, scale)
    scale = jnp.where(scale == -jnp.inf, -1.0, scale)
    return scale


def _finalize_from_sums(plS, sS, ssS, n_elems, depth, mode, out_dtype):
    """Per-row FTanimoto from the three reduced sums (all (tm, 1) f32)."""
    n = jnp.float32(n_elems)
    sqS = ssS - 2.0 * plS  # sum(p*p) + sum(l*l)
    # Complement path via identities (no (1-p)/(1-l) materialization):
    #   sum((1-p)(1-l))             = n - sum(p+l) + sum(p*l)
    #   sum((1-p)^2) + sum((1-l)^2) = 2n - 2*sum(p+l) + (sum(p^2)+sum(l^2))
    c_plS = n - sS + plS
    c_sqS = 2.0 * n - 2.0 * sS + sqS

    def tnmt(pls_, sqs_, d):
        a = float(2 ** d)
        b = -(2.0 * a - 1.0)
        scale = _nan_to_num_scale(1.0 / (a * sqs_ + b * pls_))
        return pls_ * scale

    def base(pls_, sqs_):
        if mode == "exact" or depth == 0:
            return tnmt(pls_, sqs_, depth)
        # 'avg' mode: only cheap (tm, 1) arithmetic per fractal depth — the
        # full-tile reductions were done once, outside this loop.
        acc = jnp.zeros_like(pls_)
        for d in range(depth + 1):
            acc = acc + tnmt(pls_, sqs_, d)
        return acc * (1.0 / (depth + 1.0))

    return (0.5 * (base(plS, sqS) + base(c_plS, c_sqS))).astype(out_dtype)


def _ftnmt_kernel_single(p_ref, l_ref, o_ref, *, depth, mode, n_elems):
    """Grid: (row tiles,). One block spans all of S — no scratch round-trip."""
    p = p_ref[...].astype(jnp.float32)
    l = l_ref[...].astype(jnp.float32)
    s = p + l
    plS = jnp.sum(p * l, axis=-1, keepdims=True)
    sS = jnp.sum(s, axis=-1, keepdims=True)
    ssS = jnp.sum(s * s, axis=-1, keepdims=True)
    o_ref[...] = _finalize_from_sums(plS, sS, ssS, n_elems, depth, mode,
                                     o_ref.dtype)


def _ftnmt_kernel_multi(p_ref, l_ref, o_ref, acc_ref, *, depth, mode, n_elems,
                        ts, ragged):
    """Grid: (row tiles [parallel], S tiles [arbitrary, reduction])."""
    k = pl.program_id(1)
    nk = pl.num_programs(1)

    @pl.when(k == 0)
    def _init():
        acc_ref[...] = jnp.zeros_like(acc_ref)

    def lane_partial(x):
        # (tm, ts) -> (tm, 128): VPU-only partial reduction over aligned
        # 128-lane chunks; the single cross-lane (XLU) reduce is deferred to
        # the finalize branch, and the accumulator stays lane-dense (no masked
        # (tm, 1) RMW stores per step).
        r = x[:, 0:128]
        for c in range(1, ts // 128):
            r = r + x[:, c * 128:(c + 1) * 128]
        return r

    def accumulate(p, l):
        s = p + l
        acc_ref[0] += lane_partial(p * l)
        acc_ref[1] += lane_partial(s)
        acc_ref[2] += lane_partial(s * s)

    if ragged:
        # Only the last S block can run past S; its out-of-bounds columns are
        # garbage and MUST be masked before accumulation.
        @pl.when(k == nk - 1)
        def _masked():
            col = k * ts + jax.lax.broadcasted_iota(jnp.int32, p_ref.shape, 1)
            valid = col < n_elems
            accumulate(jnp.where(valid, p_ref[...].astype(jnp.float32), 0.0),
                       jnp.where(valid, l_ref[...].astype(jnp.float32), 0.0))

        @pl.when(k < nk - 1)
        def _full():
            accumulate(p_ref[...].astype(jnp.float32),
                       l_ref[...].astype(jnp.float32))
    else:
        accumulate(p_ref[...].astype(jnp.float32),
                   l_ref[...].astype(jnp.float32))

    @pl.when(k == nk - 1)
    def _finalize():
        plS = jnp.sum(acc_ref[0], axis=-1, keepdims=True)
        sS = jnp.sum(acc_ref[1], axis=-1, keepdims=True)
        ssS = jnp.sum(acc_ref[2], axis=-1, keepdims=True)
        o_ref[...] = _finalize_from_sums(plS, sS, ssS, n_elems, depth, mode,
                                         o_ref.dtype)


def _round_up(x, m):
    return ((x + m - 1) // m) * m


def _vmem_capacity_bytes():
    try:
        return int(pltpu.get_tpu_info().vmem_capacity_bytes)
    except Exception:
        return 64 * 1024 * 1024  # conservative (v7x per-core) fallback


def ftanimoto(preds, labels, *, depth=0, mode="exact", block_bytes=None):
    """FTanimoto.forward for NCHW inputs with axis=[2, 3] (keepdim=True)."""
    if mode not in ("exact", "avg"):
        raise ValueError("variable mode must be one of 'avg' or 'exact'")
    assert preds.shape == labels.shape
    assert preds.dtype == labels.dtype
    N, C, H, W = preds.shape
    R, S = N * C, H * W

    dtype = preds.dtype
    itemsize = jnp.dtype(dtype).itemsize
    sublane = {1: 32, 2: 16}.get(itemsize, 8)  # sublane packing by dtype width
    lane = 128

    vmem_cap = _vmem_capacity_bytes()
    # Per-input block target: ~cap/8 (≈8 MiB on v7x, ≈16 MiB on v5e/v6e);
    # 2 inputs x 2 pipeline buffers stays well under the scoped limit below.
    if block_bytes is None:
        block_bytes = max(2 * 1024 * 1024, vmem_cap // 8)
    vmem_limit = int((vmem_cap * 3) // 4)

    # Free reshape (NCHW is contiguous over H, W); no padding / extra HBM copy.
    p2 = preds.reshape(R, S)
    l2 = labels.reshape(R, S)

    kw = dict(depth=depth, mode=mode, n_elems=S)

    if sublane * S * itemsize <= block_bytes:
        # ---- single-K path: one block spans all of S; no scratch needed. ----
        tm = (block_bytes // (S * itemsize)) // sublane * sublane
        tm = max(sublane, min(tm, _round_up(R, sublane)))
        # Give the 'parallel' row axis >= 2 blocks when R allows (v7x megacore).
        while pl.cdiv(R, tm) < 2 and tm > sublane:
            tm = max(sublane, (tm // 2) // sublane * sublane)
        grid = (pl.cdiv(R, tm),)
        out = pl.pallas_call(
            functools.partial(_ftnmt_kernel_single, **kw),
            out_shape=jax.ShapeDtypeStruct((R, 1), dtype),
            grid_spec=pltpu.PrefetchScalarGridSpec(
                num_scalar_prefetch=0,
                grid=grid,
                in_specs=[pl.BlockSpec((tm, S), lambda i: (i, 0)),
                          pl.BlockSpec((tm, S), lambda i: (i, 0))],
                out_specs=pl.BlockSpec((tm, 1), lambda i: (i, 0)),
            ),
            compiler_params=pltpu.CompilerParams(
                dimension_semantics=("parallel",),
                vmem_limit_bytes=vmem_limit,
            ),
        )(p2, l2)
    else:
        # ---- multi-K path: tile the reduction axis (bounded VMEM), one ----
        # ---- packed lane-dense accumulator, masked ragged last block.   ----
        tm = min(_round_up(R, sublane), 8 * sublane)
        while pl.cdiv(R, tm) < 2 and tm > sublane:
            tm = max(sublane, (tm // 2) // sublane * sublane)
        ts = max(lane, (block_bytes // (tm * itemsize)) // lane * lane)
        ts = min(ts, _round_up(S, lane))
        ragged = (S % ts) != 0
        grid = (pl.cdiv(R, tm), pl.cdiv(S, ts))
        out = pl.pallas_call(
            functools.partial(_ftnmt_kernel_multi, ts=ts, ragged=ragged, **kw),
            out_shape=jax.ShapeDtypeStruct((R, 1), dtype),
            grid_spec=pltpu.PrefetchScalarGridSpec(
                num_scalar_prefetch=0,
                grid=grid,
                in_specs=[pl.BlockSpec((tm, ts), lambda i, k: (i, k)),
                          pl.BlockSpec((tm, ts), lambda i, k: (i, k))],
                out_specs=pl.BlockSpec((tm, 1), lambda i, k: (i, 0)),
                # One packed, lane-dense accumulator: rows 0/1/2 hold the
                # partial sums of p*l, p+l, (p+l)^2.
                scratch_shapes=[pltpu.VMEM((3, tm, 128), jnp.float32)],
            ),
            compiler_params=pltpu.CompilerParams(
                dimension_semantics=("parallel", "arbitrary"),
                vmem_limit_bytes=vmem_limit,
            ),
        )(p2, l2)

    return out.reshape(N, C, 1, 1)


def ftanimoto_ref(preds, labels, *, depth=0, mode="exact"):
    """Pure-JAX reference mirroring the PyTorch module."""
    def tnmt(p, l, d):
        pl_s = jnp.sum(p * l, axis=(2, 3), keepdims=True)
        pp_s = jnp.sum(p * p, axis=(2, 3), keepdims=True)
        ll_s = jnp.sum(l * l, axis=(2, 3), keepdims=True)
        a = float(2 ** d)
        b = -(2.0 * a - 1.0)
        scale = _nan_to_num_scale(1.0 / (a * (pp_s + ll_s) + b * pl_s))
        return pl_s * scale

    def base(p, l):
        if mode == "exact" or depth == 0:
            return tnmt(p, l, depth)
        acc = 0.0
        for d in range(depth + 1):
            acc = acc + tnmt(p, l, d)
        return acc * (1.0 / (depth + 1.0))

    return 0.5 * (base(preds, labels) + base(1.0 - preds, 1.0 - labels))


# TODO(synk): only the forward pass is implemented; the custom autograd backward
# of tnmt_2d is not translated (would need a jax.custom_vjp around the kernel).

if __name__ == "__main__":
    key = jax.random.PRNGKey(0)
    k1, k2 = jax.random.split(key)

    # Small NCHW shapes; probabilities / {0,1} labels, like the module expects.
    N, C, H, W = 2, 4, 16, 16
    preds = jax.random.uniform(k1, (N, C, H, W), dtype=jnp.float32)
    labels = (jax.random.uniform(k2, (N, C, H, W)) > 0.5).astype(jnp.float32)

    # exact mode, depth 0 (single-K, scratch-free path)
    out = jax.block_until_ready(ftanimoto(preds, labels, depth=0, mode="exact"))
    ref = ftanimoto_ref(preds, labels, depth=0, mode="exact")
    assert out.shape == (N, C, 1, 1), out.shape
    assert jnp.allclose(out, ref, atol=1e-5, rtol=1e-5), (out, ref)

    # avg mode, depth 3 (exercises the hoisted fractal-depth loop)
    out2 = jax.block_until_ready(ftanimoto(preds, labels, depth=3, mode="avg"))
    ref2 = ftanimoto_ref(preds, labels, depth=3, mode="avg")
    assert jnp.allclose(out2, ref2, atol=1e-5, rtol=1e-5), (out2, ref2)

    # S-tiled path with a ragged last S block (forced via a tiny block budget):
    # S = 400, ts = 256 -> 2 reduction steps, last one masked in-kernel.
    H2 = W2 = 20
    p3 = jax.random.uniform(k1, (N, C, H2, W2), dtype=jnp.float32)
    l3 = (jax.random.uniform(k2, (N, C, H2, W2)) > 0.5).astype(jnp.float32)
    out3 = jax.block_until_ready(
        ftanimoto(p3, l3, depth=2, mode="avg", block_bytes=8 * 1024))
    ref3 = ftanimoto_ref(p3, l3, depth=2, mode="avg")
    assert jnp.allclose(out3, ref3, atol=1e-5, rtol=1e-5), (out3, ref3)

    print("KERNEL_OK")
</pallas_src>

<mosaic_0001>
module attributes {stable_mosaic.version = 11 : i64} {
  func.func @_ftnmt_kernel_single(%arg0: i32, %arg1: memref<8x256xf32, #tpu.memory_space<vmem>>, %arg2: memref<8x256xf32, #tpu.memory_space<vmem>>, %arg3: memref<8x1xf32, #tpu.memory_space<vmem>>) attributes {dimension_semantics = [#tpu.dimension_semantics<parallel>], iteration_bounds = array<i64: 1>, scalar_prefetch = 0 : i64, scratch_operands = 0 : i64, tpu.core_type = #tpu.core_type<tc>, window_params = [{transform_indices = @transform_0, window_bounds = array<i64: 8, 256>}, {transform_indices = @transform_1, window_bounds = array<i64: 8, 256>}, {transform_indices = @transform_2, window_bounds = array<i64: 8, 1>}]} {
    %c0 = arith.constant 0 : index
    %c0_0 = arith.constant 0 : index
    %0 = vector.load %arg1[%c0, %c0_0] : memref<8x256xf32, #tpu.memory_space<vmem>>, vector<8x256xf32>
    %c0_1 = arith.constant 0 : index
    %c0_2 = arith.constant 0 : index
    %1 = vector.load %arg2[%c0_1, %c0_2] : memref<8x256xf32, #tpu.memory_space<vmem>>, vector<8x256xf32>
    %2 = arith.addf %0, %1 : vector<8x256xf32>
    %3 = arith.mulf %0, %1 : vector<8x256xf32>
    %cst = arith.constant dense<0.000000e+00> : vector<8xf32>
    %4 = vector.multi_reduction <add>, %3, %cst [1] : vector<8x256xf32> to vector<8xf32>
    %5 = vector.shape_cast %4 : vector<8xf32> to vector<8x1xf32>
    %cst_3 = arith.constant dense<0.000000e+00> : vector<8xf32>
    %6 = vector.multi_reduction <add>, %2, %cst_3 [1] : vector<8x256xf32> to vector<8xf32>
    %7 = vector.shape_cast %6 : vector<8xf32> to vector<8x1xf32>
    %8 = arith.mulf %2, %2 : vector<8x256xf32>
    %cst_4 = arith.constant dense<0.000000e+00> : vector<8xf32>
    %9 = vector.multi_reduction <add>, %8, %cst_4 [1] : vector<8x256xf32> to vector<8xf32>
    %10 = vector.shape_cast %9 : vector<8xf32> to vector<8x1xf32>
    %cst_5 = arith.constant 2.000000e+00 : f32
    %11 = vector.broadcast %cst_5 : f32 to vector<8x1xf32>
    %12 = arith.mulf %11, %5 : vector<8x1xf32>
    %13 = arith.subf %10, %12 : vector<8x1xf32>
    %cst_6 = arith.constant 2.560000e+02 : f32
    %14 = vector.broadcast %cst_6 : f32 to vector<8x1xf32>
    %15 = arith.subf %14, %7 : vector<8x1xf32>
    %16 = arith.addf %15, %5 : vector<8x1xf32>
    %cst_7 = arith.constant 2.000000e+00 : f32
    %cst_8 = arith.constant 2.560000e+02 : f32
    %17 = arith.mulf %cst_7, %cst_8 : f32
    %cst_9 = arith.constant 2.000000e+00 : f32
    %18 = vector.broadcast %cst_9 : f32 to vector<8x1xf32>
    %19 = arith.mulf %18, %7 : vector<8x1xf32>
    %20 = vector.broadcast %17 : f32 to vector<8x1xf32>
    %21 = arith.subf %20, %19 : vector<8x1xf32>
    %22 = arith.addf %21, %13 : vector<8x1xf32>
    %cst_10 = arith.constant 1.000000e+00 : f32
    %23 = vector.broadcast %cst_10 : f32 to vector<8x1xf32>
    %24 = arith.mulf %23, %13 : vector<8x1xf32>
    %cst_11 = arith.constant -1.000000e+00 : f32
    %25 = vector.broadcast %cst_11 : f32 to vector<8x1xf32>
    %26 = arith.mulf %25, %5 : vector<8x1xf32>
    %27 = arith.addf %24, %26 : vector<8x1xf32>
    %cst_12 = arith.constant 1.000000e+00 : f32
    %28 = vector.broadcast %cst_12 : f32 to vector<8x1xf32>
    %29 = arith.divf %28, %27 : vector<8x1xf32>
    %30 = arith.cmpf one, %29, %29 : vector<8x1xf32>
    %cst_13 = arith.constant 0.000000e+00 : f32
    %31 = vector.broadcast %cst_13 : f32 to vector<8x1xf32>
    %32 = arith.select %30, %31, %29 : vector<8x1xi1>, vector<8x1xf32>
    %cst_14 = arith.constant 0x7F800000 : f32
    %33 = vector.broadcast %cst_14 : f32 to vector<8x1xf32>
    %34 = arith.cmpf oeq, %32, %33 : vector<8x1xf32>
    %cst_15 = arith.constant 1.000000e+00 : f32
    %35 = vector.broadcast %cst_15 : f32 to vector<8x1xf32>
    %36 = arith.select %34, %35, %32 : vector<8x1xi1>, vector<8x1xf32>
    %cst_16 = arith.constant 0xFF800000 : f32
    %37 = vector.broadcast %cst_16 : f32 to vector<8x1xf32>
    %38 = arith.cmpf oeq, %36, %37 : vector<8x1xf32>
    %cst_17 = arith.constant -1.000000e+00 : f32
    %39 = vector.broadcast %cst_17 : f32 to vector<8x1xf32>
    %40 = arith.select %38, %39, %36 : vector<8x1xi1>, vector<8x1xf32>
    %41 = arith.mulf %5, %40 : vector<8x1xf32>
    %cst_18 = arith.constant 1.000000e+00 : f32
    %42 = vector.broadcast %cst_18 : f32 to vector<8x1xf32>
    %43 = arith.mulf %42, %22 : vector<8x1xf32>
    %cst_19 = arith.constant -1.000000e+00 : f32
    %44 = vector.broadcast %cst_19 : f32 to vector<8x1xf32>
    %45 = arith.mulf %44, %16 : vector<8x1xf32>
    %46 = arith.addf %43, %45 : vector<8x1xf32>
    %cst_20 = arith.constant 1.000000e+00 : f32
    %47 = vector.broadcast %cst_20 : f32 to vector<8x1xf32>
    %48 = arith.divf %47, %46 : vector<8x1xf32>
    %49 = arith.cmpf one, %48, %48 : vector<8x1xf32>
    %cst_21 = arith.constant 0.000000e+00 : f32
    %50 = vector.broadcast %cst_21 : f32 to vector<8x1xf32>
    %51 = arith.select %49, %50, %48 : vector<8x1xi1>, vector<8x1xf32>
    %cst_22 = arith.constant 0x7F800000 : f32
    %52 = vector.broadcast %cst_22 : f32 to vector<8x1xf32>
    %53 = arith.cmpf oeq, %51, %52 : vector<8x1xf32>
    %cst_23 = arith.constant 1.000000e+00 : f32
    %54 = vector.broadcast %cst_23 : f32 to vector<8x1xf32>
    %55 = arith.select %53, %54, %51 : vector<8x1xi1>, vector<8x1xf32>
    %cst_24 = arith.constant 0xFF800000 : f32
    %56 = vector.broadcast %cst_24 : f32 to vector<8x1xf32>
    %57 = arith.cmpf oeq, %55, %56 : vector<8x1xf32>
    %cst_25 = arith.constant -1.000000e+00 : f32
    %58 = vector.broadcast %cst_25 : f32 to vector<8x1xf32>
    %59 = arith.select %57, %58, %55 : vector<8x1xi1>, vector<8x1xf32>
    %60 = arith.mulf %16, %59 : vector<8x1xf32>
    %61 = arith.addf %41, %60 : vector<8x1xf32>
    %cst_26 = arith.constant 5.000000e-01 : f32
    %62 = vector.broadcast %cst_26 : f32 to vector<8x1xf32>
    %63 = arith.mulf %62, %61 : vector<8x1xf32>
    %c0_27 = arith.constant 0 : index
    %c0_28 = arith.constant 0 : index
    %64 = vector.load %arg3[%c0_27, %c0_28] : memref<8x1xf32, #tpu.memory_space<vmem>>, vector<8x1xf32>
    tpu.vector_store %arg3[%c0_27, %c0_28], %63 {strides = array<i32>} : memref<8x1xf32, #tpu.memory_space<vmem>>, vector<8x1xf32>,
    return
  }
  func.func @transform_0(%arg0: i32) -> (i32, i32) {
    %c0_i32 = arith.constant 0 : i32
    %c0_i32_0 = arith.constant 0 : i32
    return %arg0, %c0_i32 : i32, i32
  }
  func.func @transform_1(%arg0: i32) -> (i32, i32) {
    %c0_i32 = arith.constant 0 : i32
    %c0_i32_0 = arith.constant 0 : i32
    return %arg0, %c0_i32 : i32, i32
  }
  func.func @transform_2(%arg0: i32) -> (i32, i32) {
    %c0_i32 = arith.constant 0 : i32
    %c0_i32_0 = arith.constant 0 : i32
    return %arg0, %c0_i32 : i32, i32
  }
}

</mosaic_0001>

<llo_original>
// kernel: tpu_custom_call.1
$region0: #{tpu_custom_call.1}
  #allocation0 [shape = 'u32[]', space=smem, size = 0x4, offset = 0x4, fixed_abs, tag = 'smem constant byte address 0x4 - core index']
  #allocation1 [shape = 'u32[144,128]{1,0:T(1,128)}', space=vmem, size = 0x12000, scoped, tag = 'internal scratch']
  %s0 = inlined_call_operand.hbm [shape: f32[8,256], index: 0, kind: input, shape index: {}]
  %s1 = inlined_call_operand.hbm [shape: f32[8,256], index: 1, kind: input, shape index: {}]
  %s2 = inlined_call_operand.vmem [shape: f32[8,1], index: 2, kind: output, shape index: {}]
  %s3 = sld [smem:[#allocation0]]
  $region26: #{tpu_custom_call.1} parent=0
    _
  %s5 = ssub.s32 1, %s3
  %s6 = scalar_select 0, %s5, %s3
  $region1: #{tpu_custom_call.1} parent=0
    #allocation2 [shape = 'u8[8192]{0}', space=vmem, size = 0x2000, scoped, tag = 'input window, operand 0, single buffered']
    #allocation3 [shape = 's32[1]{0}', space=sflag, size = 0x4, scoped, tag = 'scoped memory for tpu_custom_call.1']
    #allocation4 [shape = 'u8[8192]{0}', space=vmem, size = 0x2000, scoped, tag = 'input window, operand 1, single buffered']
    #allocation5 [shape = 's32[1]{0}', space=sflag, size = 0x4, scoped, tag = 'scoped memory for tpu_custom_call.1']
    %7 = vsyncpa [#allocation3], 0
    %8 = vsyncpa [#allocation5], 0
    // Predicated region
    $region2: #{tpu_custom_call.1} parent=1 // pred_check
      _
    $region3: #{tpu_custom_call.1} parent=1 // pred_check_branch
      %10 = sbr.rel (0) target = $region5
    $region4: #{tpu_custom_call.1} parent=1 // pred_region
      %s12 = ssub.s32 256, 256
      %13 = vsyncadd [#allocation3], %s12
      %s15 = sshll.u32 [#allocation2], 4
      %s16 = int_to_ptr.vmem [resolvable:$true] %s15
      %18 = dma.hbm_to_vmem [thread:$0]  %s0, 256, %s16, [#allocation3]
    $region5: #{tpu_custom_call.1} parent=1 // pred_fallthru
      _
    // Predicated region
    $region6: #{tpu_custom_call.1} parent=1 // pred_check
      _
    $region7: #{tpu_custom_call.1} parent=1 // pred_check_branch
      %20 = sbr.rel (0) target = $region9
    $region8: #{tpu_custom_call.1} parent=1 // pred_region
      %s22 = ssub.s32 256, 256
      %23 = vsyncadd [#allocation5], %s22
      %s25 = sshll.u32 [#allocation4], 4
      %s26 = int_to_ptr.vmem [resolvable:$true] %s25
      %28 = dma.hbm_to_vmem [thread:$0]  %s1, 256, %s26, [#allocation5]
    $region9: #{tpu_custom_call.1} parent=1 // pred_fallthru
      _
    // Predicated region
    $region10: #{tpu_custom_call.1} parent=1 // pred_check
      _
    $region11: #{tpu_custom_call.1} parent=1 // pred_check_branch
      %30 = sbr.rel (0) target = $region13
    $region12: #{tpu_custom_call.1} parent=1 // pred_region
      %31 = dma.done [#allocation3], 256
    $region13: #{tpu_custom_call.1} parent=1 // pred_fallthru
      _
    // Predicated region
    $region14: #{tpu_custom_call.1} parent=1 // pred_check
      _
    $region15: #{tpu_custom_call.1} parent=1 // pred_check_branch
      %33 = sbr.rel (0) target = $region17
    $region16: #{tpu_custom_call.1} parent=1 // pred_region
      %34 = dma.done [#allocation5], 256
    $region17: #{tpu_custom_call.1} parent=1 // pred_fallthru
      _
    %v35 = vld [vmem:[#allocation2] sm:$0xff]
    %v36 = vld [vmem:[#allocation2 + $0x8] sm:$0xff]
    %v37 = vld [vmem:[#allocation4] sm:$0xff]
    %v38 = vld [vmem:[#allocation4 + $0x8] sm:$0xff]
    %v39 = vadd.f32 %v35, %v37
    %v40 = vadd.f32 %v36, %v38
    %v41 = vmul.f32 %v35, %v37
    %v42 = vmul.f32 %v36, %v38
    %v43 = vadd.f32 %v41, %v42
    %44 = vadd.xlane.f32.xlu0 %v43
    %v45 = vpop.xlane.xlu0 %44
    %v46 = vadd.f32 %v39, %v40
    %47 = vadd.xlane.f32.xlu0 %v46
    %v48 = vpop.xlane.xlu0 %47
    %v49 = vmul.f32 %v39, %v39
    %v50 = vmul.f32 %v40, %v40
    %v51 = vadd.f32 %v49, %v50
    %52 = vadd.xlane.f32.xlu0 %v51
    %v53 = vpop.xlane.xlu0 %52
    %v54 = vmul.f32 %v45, 2.0
    %v55 = vsub.f32 %v53, %v54
    %v56 = vsub.f32 256.0, %v48
    %v57 = vadd.f32 %v56, %v45
    %v58 = vmul.f32 %v48, 2.0
    %v59 = vsub.f32 512.0, %v58
    %v60 = vadd.f32 %v59, %v55
    %v61 = vmul.f32 %v45, -1.0
    %v62 = vadd.f32 %v55, %v61
    %v63 = vrcp.pop %v62
    %v64 = vmul.f32 1.0, %v63
    %vm65 = vcmp.ne.f32.partialorder %v64, %v64
    %v66 = vsel %vm65, 0.0, %v64
    %vm67 = vcmp.eq.f32.partialorder %v66, inf
    %v68 = vsel %vm67, 1.0, %v66
    %vm69 = vcmp.eq.f32.partialorder %v68, -inf
    %v70 = vsel %vm69, -1.0, %v68
    %v71 = vmul.f32 %v45, %v70
    %v72 = vmul.f32 %v57, -1.0
    %v73 = vadd.f32 %v60, %v72
    %v74 = vrcp.pop %v73
    %v75 = vmul.f32 1.0, %v74
    %vm76 = vcmp.ne.f32.partialorder %v75, %v75
    %v77 = vsel %vm76, 0.0, %v75
    %vm78 = vcmp.eq.f32.partialorder %v77, inf
    %v79 = vsel %vm78, 1.0, %v77
    %vm80 = vcmp.eq.f32.partialorder %v79, -inf
    %v81 = vsel %vm80, -1.0, %v79
    %v82 = vmul.f32 %v57, %v81
    %v83 = vadd.f32 %v71, %v82
    %v84 = vmul.f32 %v83, 0.5
    %vm85 = vcmask 7168
    %86 = vst.msk [vmem:[%s2] sm:$0xff] %vm85, %v84
    // Predicated region
    $region18: #{tpu_custom_call.1} parent=1 // pred_check
      _
    $region19: #{tpu_custom_call.1} parent=1 // pred_check_branch
      %88 = sbr.rel (0) target = $region21
    $region20: #{tpu_custom_call.1} parent=1 // pred_region
      _
    $region21: #{tpu_custom_call.1} parent=1 // pred_fallthru
      _
    // Predicated region
    $region22: #{tpu_custom_call.1} parent=1 // pred_check
      _
    $region23: #{tpu_custom_call.1} parent=1 // pred_check_branch
      %90 = sbr.rel (0) target = $region25
    $region24: #{tpu_custom_call.1} parent=1 // pred_region
      _
    $region25: #{tpu_custom_call.1} parent=1 // pred_fallthru
      _
    %91 = vsyncpa [#allocation3], 1
    %92 = vsyncpa [#allocation5], 1

</llo_original>
